<compile_context>
chip_gen: v7x
topology: tpu7x:2x2x1
jax: 0.10.0
libtpu: 0.0.40
codegen_flags: <defaults>
</compile_context>

<pallas_src>
import functools

import jax
import jax.numpy as jnp
from jax.experimental import pallas as pl
from jax.experimental.pallas import tpu as pltpu


def _darknet_tiny_kernel(xt_ref, xb_ref, w_ref, b_ref, o_ref, *, neg_slope):
    # xt_ref: (TH, W+2, C)     bf16  padded-image rows [s*TH, s*TH+TH)
    # xb_ref: (2,  W+2, C)     bf16  halo rows [s*TH+TH, s*TH+TH+2)
    # w_ref : (9C, F)          bf16  BN-scale-folded weights, K order (ky, kx, C)
    # b_ref : (1, F)           f32   folded BN bias
    # o_ref : (TH//2, W//2, F) bf16
    TH, Wp, C = xt_ref.shape
    W = Wp - 2
    F = w_ref.shape[1]
    THo, Wo = TH // 2, W // 2

    # (TH+2, W+2, C) halo strip: leading-axis concat of the two HBM views.
    x = jnp.concatenate([xt_ref[...], xb_ref[...]], axis=0)

    # Widen the three kx taps onto the lane axis ONCE: (TH+2, W, 3C).
    xs = jnp.concatenate(
        [x[:, 0:W, :], x[:, 1:W + 1, :], x[:, 2:W + 2, :]], axis=-1)
    # ky taps via free leading-dim slices -> (TH, W, 9C), K order (ky, kx, C).
    xs = jnp.concatenate([xs[0:TH], xs[1:TH + 1], xs[2:TH + 2]], axis=-1)

    # Single MXU matmul, K = 9C, N = F (bf16 inputs, f32 accumulation).  The
    # (TH, W) -> TH*W merge is layout-free when W is a multiple of the
    # sublane tile.
    y = jnp.dot(xs.reshape(TH * W, 9 * C), w_ref[...],
                preferred_element_type=jnp.float32)           # (TH*W, F) f32

    # Folded BN bias + LeakyReLU(0.1) in f32.
    y = y + b_ref[...]
    y = jnp.where(y > 0, y, neg_slope * y)

    # MaxPool 2x2 stride 2.  Row pool first via an aligned unit-stride split
    # (free leading-dim reshape + pure VPU max), then the column pool on the
    # already-halved array.
    y = y.reshape(THo, 2 * W, F)
    r = jnp.maximum(y[:, :W, :], y[:, W:, :])                 # (THo, W, F)
    # TODO(synk): a strided sublane slice (r[:, 0::2] vs r[:, 1::2]) would
    # avoid the (..., 2, F) retile once strided value slices lower cleanly.
    p = jnp.max(r.reshape(THo, Wo, 2, F), axis=2)             # (THo, Wo, F)

    o_ref[...] = p.astype(o_ref.dtype)


def _vmem_capacity_bytes():
    """Per-TensorCore VMEM (v5e/v6e: 128 MiB, v7x: 64 MiB)."""
    try:
        return int(pltpu.get_tpu_info().vmem_capacity_bytes)
    except Exception:
        return 64 << 20                      # most conservative (v7x per-TC)


def _strip_vmem_bytes(th, W, C, F):
    """Rough per-step VMEM footprint for a TH-row strip (bf16 I/O, f32 act)."""
    tho, wo = th // 2, W // 2
    bf, f32 = 2, 4
    io = 2 * (((th + 2) * (W + 2) * C + 9 * C * F + tho * wo * F) * bf + F * f32)
    slab = ((th + 2) * (W + 2) * C + (th + 2) * W * 3 * C + th * W * 9 * C) * bf
    act = (th * W * F + tho * W * F + tho * wo * 2 * F) * f32
    return io + slab + act


def _auto_strip_rows(H, W, C, F, N, budget_bytes):
    """Largest even divisor of H that fits the VMEM budget, preferring enough
    grid steps (N*S >= 4) to feed both TensorCores (v7x) and the pipeline."""
    divisors = [th for th in range(2, H + 1, 2) if H % th == 0]
    fits = [th for th in divisors
            if _strip_vmem_bytes(th, W, C, F) <= budget_bytes]
    if not fits:
        fits = [min(divisors)]
    for min_steps in (4, 2, 1):
        cands = [th for th in fits if N * (H // th) >= min_steps]
        if cands:
            return max(cands)
    return max(fits)


def darknet_tiny_block(x_nchw, conv_weight, gamma, beta, running_mean,
                       running_var, *, eps=1e-5, neg_slope=0.1,
                       strip_rows=None, out_dtype=jnp.bfloat16):
    """x_nchw: (N, C, H, W). conv_weight: (F, C, 3, 3).
    Returns (N, F, H//2, W//2) in `out_dtype`."""
    N, C, H, W = x_nchw.shape
    F = conv_weight.shape[0]
    assert H % 2 == 0 and W % 2 == 0, "even spatial dims expected for 2x2/2 maxpool"

    vmem_cap = _vmem_capacity_bytes()
    if strip_rows is None:
        strip_rows = _auto_strip_rows(H, W, C, F, N,
                                      budget_bytes=int(0.45 * vmem_cap))
    TH = strip_rows
    assert TH % 2 == 0 and H % TH == 0, (TH, H)
    S = H // TH
    THo, Wo, Ho = TH // 2, W // 2, H // 2

    # Never request less than the chosen strip needs (fallback TH=2 must not
    # be starved), never more than ~90% of physical per-core VMEM.
    need = _strip_vmem_bytes(TH, W, C, F)
    vmem_limit = int(min(0.9 * vmem_cap, max(32 << 20, 2 * need)))

    # ---- glue (plain JAX) --------------------------------------------------
    # BN folding in f32, then bf16 weights for the fast MXU path.
    scale = (gamma / jnp.sqrt(running_var + eps)).astype(jnp.float32)       # (F,)
    bias = (beta - running_mean * scale).astype(jnp.float32).reshape(1, F)  # f32
    w9 = jnp.transpose(conv_weight, (2, 3, 1, 0)).astype(jnp.float32) * scale
    w9 = w9.reshape(9 * C, F).astype(jnp.bfloat16)            # K order (ky, kx, C)

    # Single fused pass: f32 NCHW -> bf16 NHWC with the 1-px conv border.
    x = jnp.transpose(x_nchw, (0, 2, 3, 1)).astype(jnp.bfloat16)
    x_pad = jnp.pad(x, ((0, 0), (1, 1), (1, 1), (0, 0)))      # (N, H+2, W+2, C)

    kernel = functools.partial(_darknet_tiny_kernel, neg_slope=neg_slope)

    out = pl.pallas_call(
        kernel,
        out_shape=jax.ShapeDtypeStruct((N, Ho, Wo, F), jnp.bfloat16),
        grid_spec=pltpu.PrefetchScalarGridSpec(
            num_scalar_prefetch=0,
            grid=(N, S),
            in_specs=[
                # Two Blocked views of the SAME padded array deliver the
                # overlapping (TH+2)-row halo window without an HBM gather.
                # (If DMA is still exposed, pipeline_mode=pl.Buffered(3) on
                # these two specs deepens the pipeline.)
                pl.BlockSpec((None, TH, W + 2, C),
                             lambda n, s: (n, s, 0, 0)),
                pl.BlockSpec((None, 2, W + 2, C),
                             lambda n, s: (n, (s + 1) * (TH // 2), 0, 0)),
                pl.BlockSpec((9 * C, F), lambda n, s: (0, 0)),
                pl.BlockSpec((1, F), lambda n, s: (0, 0)),
            ],
            out_specs=pl.BlockSpec((None, THo, Wo, F),
                                   lambda n, s: (n, s, 0, 0)),
        ),
        compiler_params=pltpu.CompilerParams(
            dimension_semantics=("parallel", "parallel"),
            vmem_limit_bytes=vmem_limit),
    )(x_pad, x_pad, w9, bias)

    # NHWC -> NCHW on the small pooled output only.
    out = jnp.transpose(out, (0, 3, 1, 2))
    return out.astype(out_dtype) if out_dtype is not None else out


def _reference(x_nchw, conv_weight, gamma, beta, running_mean, running_var,
               eps=1e-5, neg_slope=0.1):
    y = jax.lax.conv_general_dilated(
        x_nchw, conv_weight, window_strides=(1, 1), padding="SAME",
        dimension_numbers=("NCHW", "OIHW", "NCHW"))
    scale = gamma / jnp.sqrt(running_var + eps)
    bias = beta - running_mean * scale
    y = y * scale[None, :, None, None] + bias[None, :, None, None]
    y = jnp.where(y > 0, y, neg_slope * y)
    return jax.lax.reduce_window(y, -jnp.inf, jax.lax.max,
                                 (1, 1, 2, 2), (1, 1, 2, 2), "VALID")


if __name__ == "__main__":
    key = jax.random.PRNGKey(0)
    k_x, k_w, k_g, k_b, k_m, k_v = jax.random.split(key, 6)

    N, C, H, W = 2, 4, 16, 16
    F = 8  # filters

    x = jax.random.normal(k_x, (N, C, H, W), dtype=jnp.float32)
    conv_weight = 0.1 * jax.random.normal(k_w, (F, C, 3, 3), dtype=jnp.float32)
    gamma = 1.0 + 0.1 * jax.random.normal(k_g, (F,), dtype=jnp.float32)
    beta = 0.1 * jax.random.normal(k_b, (F,), dtype=jnp.float32)
    running_mean = 0.1 * jax.random.normal(k_m, (F,), dtype=jnp.float32)
    running_var = 1.0 + 0.1 * jnp.abs(jax.random.normal(k_v, (F,), dtype=jnp.float32))

    # strip_rows=8 -> 2 row-strips/image, grid=(2, 2): exercises the two-view
    # halo path and gives both TensorCores (v7x) work.
    out = darknet_tiny_block(x, conv_weight, gamma, beta, running_mean,
                             running_var, strip_rows=8, out_dtype=jnp.float32)
    out = jax.block_until_ready(out)

    ref = _reference(x, conv_weight, gamma, beta, running_mean, running_var)
    assert out.shape == (N, F, H // 2, W // 2), out.shape
    err = float(jnp.max(jnp.abs(out - ref)))
    # bf16 activations/weights with f32 accumulation vs. the f32 reference.
    assert jnp.allclose(out, ref, rtol=5e-2, atol=5e-2), err

    print("KERNEL_OK")
</pallas_src>

<mosaic_0001>
module attributes {stable_mosaic.version = 11 : i64} {
  func.func @_darknet_tiny_kernel(%arg0: i32, %arg1: i32, %arg2: memref<1x8x18x4xbf16, #tpu.memory_space<vmem>>, %arg3: memref<1x2x18x4xbf16, #tpu.memory_space<vmem>>, %arg4: memref<36x8xbf16, #tpu.memory_space<vmem>>, %arg5: memref<1x8xf32, #tpu.memory_space<vmem>>, %arg6: memref<1x4x8x8xbf16, #tpu.memory_space<vmem>>) attributes {dimension_semantics = [#tpu.dimension_semantics<parallel>, #tpu.dimension_semantics<parallel>], iteration_bounds = array<i64: 2, 2>, scalar_prefetch = 0 : i64, scratch_operands = 0 : i64, tpu.core_type = #tpu.core_type<tc>, window_params = [{transform_indices = @transform_0, window_bounds = array<i64: 1, 8, 18, 4>}, {transform_indices = @transform_1, window_bounds = array<i64: 1, 2, 18, 4>}, {pipeline_mode = #tpu.pipeline_mode<synchronous>, transform_indices = @transform_2, window_bounds = array<i64: 36, 8>}, {pipeline_mode = #tpu.pipeline_mode<synchronous>, transform_indices = @transform_3, window_bounds = array<i64: 1, 8>}, {transform_indices = @transform_4, window_bounds = array<i64: 1, 4, 8, 8>}]} {
    %c0 = arith.constant 0 : index
    %c0_0 = arith.constant 0 : index
    %c0_1 = arith.constant 0 : index
    %c0_2 = arith.constant 0 : index
    %0 = vector.load %arg2[%c0, %c0_0, %c0_1, %c0_2] : memref<1x8x18x4xbf16, #tpu.memory_space<vmem>>, vector<1x8x18x4xbf16>
    %1 = vector.shape_cast %0 : vector<1x8x18x4xbf16> to vector<8x18x4xbf16>
    %c0_3 = arith.constant 0 : index
    %c0_4 = arith.constant 0 : index
    %c0_5 = arith.constant 0 : index
    %c0_6 = arith.constant 0 : index
    %2 = vector.load %arg3[%c0_3, %c0_4, %c0_5, %c0_6] : memref<1x2x18x4xbf16, #tpu.memory_space<vmem>>, vector<1x2x18x4xbf16>
    %3 = vector.shape_cast %2 : vector<1x2x18x4xbf16> to vector<2x18x4xbf16>
    %4 = tpu.concatenate %1, %3 in 0 : vector<8x18x4xbf16>, vector<2x18x4xbf16> -> vector<10x18x4xbf16>
    %5 = vector.extract_strided_slice %4 {offsets = [0, 0, 0], sizes = [10, 16, 4], strides = [1, 1, 1]} : vector<10x18x4xbf16> to vector<10x16x4xbf16>
    %6 = vector.extract_strided_slice %4 {offsets = [0, 1, 0], sizes = [10, 16, 4], strides = [1, 1, 1]} : vector<10x18x4xbf16> to vector<10x16x4xbf16>
    %7 = vector.extract_strided_slice %4 {offsets = [0, 2, 0], sizes = [10, 16, 4], strides = [1, 1, 1]} : vector<10x18x4xbf16> to vector<10x16x4xbf16>
    %8 = tpu.concatenate %5, %6, %7 in 2 : vector<10x16x4xbf16>, vector<10x16x4xbf16>, vector<10x16x4xbf16> -> vector<10x16x12xbf16>
    %9 = vector.extract_strided_slice %8 {offsets = [0, 0, 0], sizes = [8, 16, 12], strides = [1, 1, 1]} : vector<10x16x12xbf16> to vector<8x16x12xbf16>
    %10 = vector.extract_strided_slice %8 {offsets = [1, 0, 0], sizes = [8, 16, 12], strides = [1, 1, 1]} : vector<10x16x12xbf16> to vector<8x16x12xbf16>
    %11 = vector.extract_strided_slice %8 {offsets = [2, 0, 0], sizes = [8, 16, 12], strides = [1, 1, 1]} : vector<10x16x12xbf16> to vector<8x16x12xbf16>
    %12 = tpu.concatenate %9, %10, %11 in 2 : vector<8x16x12xbf16>, vector<8x16x12xbf16>, vector<8x16x12xbf16> -> vector<8x16x36xbf16>
    %13 = vector.shape_cast %12 : vector<8x16x36xbf16> to vector<128x36xbf16>
    %c0_7 = arith.constant 0 : index
    %c0_8 = arith.constant 0 : index
    %14 = vector.load %arg4[%c0_7, %c0_8] : memref<36x8xbf16, #tpu.memory_space<vmem>>, vector<36x8xbf16>
    %cst = arith.constant dense<0.000000e+00> : vector<128x8xf32>
    %15 = tpu.matmul %13, %14, %cst {dimension_numbers = #tpu.dot_dimension_numbers<[1], [0], [0], [1], [0, 0, 1, 1], [], []>} : vector<128x36xbf16>, vector<36x8xbf16>, vector<128x8xf32> -> vector<128x8xf32>
    %c0_9 = arith.constant 0 : index
    %c0_10 = arith.constant 0 : index
    %16 = vector.load %arg5[%c0_9, %c0_10] : memref<1x8xf32, #tpu.memory_space<vmem>>, vector<1x8xf32>
    %17 = vector.broadcast %16 : vector<1x8xf32> to vector<128x8xf32>
    %18 = arith.addf %15, %17 : vector<128x8xf32>
    %cst_11 = arith.constant 0.000000e+00 : f32
    %19 = vector.broadcast %cst_11 : f32 to vector<128x8xf32>
    %20 = arith.cmpf ogt, %18, %19 : vector<128x8xf32>
    %cst_12 = arith.constant 1.000000e-01 : f32
    %21 = vector.broadcast %cst_12 : f32 to vector<128x8xf32>
    %22 = arith.mulf %21, %18 : vector<128x8xf32>
    %23 = arith.select %20, %18, %22 : vector<128x8xi1>, vector<128x8xf32>
    %24 = vector.shape_cast %23 : vector<128x8xf32> to vector<4x32x8xf32>
    %25 = vector.extract_strided_slice %24 {offsets = [0, 0, 0], sizes = [4, 16, 8], strides = [1, 1, 1]} : vector<4x32x8xf32> to vector<4x16x8xf32>
    %26 = vector.extract_strided_slice %24 {offsets = [0, 16, 0], sizes = [4, 16, 8], strides = [1, 1, 1]} : vector<4x32x8xf32> to vector<4x16x8xf32>
    %27 = arith.maximumf %25, %26 : vector<4x16x8xf32>
    %28 = vector.shape_cast %27 : vector<4x16x8xf32> to vector<4x8x2x8xf32>
    %cst_13 = arith.constant dense<0xFF800000> : vector<4x8x8xf32>
    %29 = vector.multi_reduction <maximumf>, %28, %cst_13 [2] : vector<4x8x2x8xf32> to vector<4x8x8xf32>
    %30 = arith.truncf %29 : vector<4x8x8xf32> to vector<4x8x8xbf16>
    %c0_14 = arith.constant 0 : index
    %c0_15 = arith.constant 0 : index
    %c0_16 = arith.constant 0 : index
    %c0_17 = arith.constant 0 : index
    %31 = vector.load %arg6[%c0_14, %c0_15, %c0_16, %c0_17] : memref<1x4x8x8xbf16, #tpu.memory_space<vmem>>, vector<1x4x8x8xbf16>
    %32 = vector.shape_cast %31 : vector<1x4x8x8xbf16> to vector<4x8x8xbf16>
    %33 = vector.shape_cast %30 : vector<4x8x8xbf16> to vector<1x4x8x8xbf16>
    tpu.vector_store %arg6[%c0_14, %c0_15, %c0_16, %c0_17], %33 {strides = array<i32>} : memref<1x4x8x8xbf16, #tpu.memory_space<vmem>>, vector<1x4x8x8xbf16>,
    return
  }
  func.func @transform_0(%arg0: i32, %arg1: i32) -> (i32, i32, i32, i32) {
    %c0_i32 = arith.constant 0 : i32
    %c0_i32_0 = arith.constant 0 : i32
    %c0_i32_1 = arith.constant 0 : i32
    return %arg0, %arg1, %c0_i32, %c0_i32_0 : i32, i32, i32, i32
  }
  func.func @transform_1(%arg0: i32, %arg1: i32) -> (i32, i32, i32, i32) {
    %c1_i32 = arith.constant 1 : i32
    %0 = arith.addi %arg1, %c1_i32 : i32
    %c4_i32 = arith.constant 4 : i32
    %1 = arith.muli %0, %c4_i32 : i32
    %c0_i32 = arith.constant 0 : i32
    %c0_i32_0 = arith.constant 0 : i32
    %c0_i32_1 = arith.constant 0 : i32
    return %arg0, %1, %c0_i32, %c0_i32_0 : i32, i32, i32, i32
  }
  func.func @transform_2(%arg0: i32, %arg1: i32) -> (i32, i32) {
    %c0_i32 = arith.constant 0 : i32
    %c0_i32_0 = arith.constant 0 : i32
    %c0_i32_1 = arith.constant 0 : i32
    return %c0_i32, %c0_i32_0 : i32, i32
  }
  func.func @transform_3(%arg0: i32, %arg1: i32) -> (i32, i32) {
    %c0_i32 = arith.constant 0 : i32
    %c0_i32_0 = arith.constant 0 : i32
    %c0_i32_1 = arith.constant 0 : i32
    return %c0_i32, %c0_i32_0 : i32, i32
  }
  func.func @transform_4(%arg0: i32, %arg1: i32) -> (i32, i32, i32, i32) {
    %c0_i32 = arith.constant 0 : i32
    %c0_i32_0 = arith.constant 0 : i32
    %c0_i32_1 = arith.constant 0 : i32
    return %arg0, %arg1, %c0_i32, %c0_i32_0 : i32, i32, i32, i32
  }
}

</mosaic_0001>

<llo_original>
// kernel: tpu_custom_call.1
$region0: #{tpu_custom_call.1}
  #allocation0 [shape = 'u32[]', space=smem, size = 0x4, offset = 0x4, fixed_abs, tag = 'smem constant byte address 0x4 - core index']
  #allocation1 [shape = 'u32[144,128]{1,0:T(1,128)}', space=vmem, size = 0x12000, scoped, tag = 'internal scratch']
  %s0 = inlined_call_operand.vmem [shape: bf16[2,18,18,4], index: 0, kind: input, shape index: {}]
  %s1 = inlined_call_operand.vmem [shape: bf16[2,18,18,4], index: 1, kind: input, shape index: {}]
  %s2 = inlined_call_operand.vmem [shape: bf16[36,8], index: 2, kind: input, shape index: {}]
  %s3 = inlined_call_operand.vmem [shape: f32[1,8], index: 3, kind: input, shape index: {}]
  %s4 = inlined_call_operand.hbm [shape: bf16[2,8,8,8], index: 4, kind: output, shape index: {}]
  %s5 = sld [smem:[#allocation0]]
  $region49: #{tpu_custom_call.1} parent=0
    _
  %s7 = ssub.s32 1, %s5
  %s8 = scalar_select 0, %s7, %s5
  $region1: #{tpu_custom_call.1} parent=0
    #allocation2 [shape = 'u8[16384]{0}', space=vmem, size = 0x4000, scoped, tag = 'output window, operand 0']
    #allocation3 [shape = 's32[2]{0}', space=sflag, size = 0x8, scoped, tag = 'scoped memory for tpu_custom_call.1']
    %9 = vsyncpa [#allocation3], 0
    %s10 = scalar_lea.sflag [#allocation3], 1
    %11 = vsyncpa %s10, 0
    loop: start=0, step=1, limit=6
    $region2: #{tpu_custom_call.1} parent=1 // loop_pre_header
      _
    $region3: #{tpu_custom_call.1} parent=1 // loop_header
      %s13 = sphi 0, %s17
      %p14 = scmp.ge.s32.totalorder %s13, 6
      %s20 = sphi 0, %s32
      %s21 = sphi 0, %s28
      %s22 = sphi 0, %s20
      %s23 = sphi 0, %s21
      %s24 = sphi 0, %s22
      %s25 = sphi 0, %s23
      %s37 = sphi 0, %s39
      %s40 = sphi 0, %s37
      %s41 = sphi 0, %s40
      %s57 = sphi 0, %s41
      %s69 = sphi 0, %s71
      %s72 = sphi 0, %s69
      %s73 = sphi 0, %s72
      %s89 = sphi 0, %s73
      %s93 = sphi 0, %s93
      %s95 = sphi 0, %s93
      %s96 = sphi 0, %s95
      %s110 = sphi 0, %s96
      %s114 = sphi 0, %s114
      %s116 = sphi 0, %s114
      %s117 = sphi 0, %s116
      %s131 = sphi 0, %s117
      %s139 = sphi 0, %s141
      %s142 = sphi 0, %s139
      %s143 = sphi 0, %s142
      %s159 = sphi 0, %s143
    $region4: #{tpu_custom_call.1} parent=1 // loop_header_branch
      %16 = sbr.rel (%p14) target = $region8
    $region5: #{tpu_custom_call.1} parent=1 // loop_body
      %s18 = ssub.s32 %s13, 1
      %s19 = ssub.s32 %s13, 2
      %s26 = sadd.s32 1, %s21
      %p27 = scmp.ge.s32.totalorder %s26, 2
      %s28 = scalar_select %p27, 0, %s26
      %s29 = sadd.s32 1, %s20
      %s30 = scalar_select %p27, %s29, %s20
      %p31 = scmp.ge.s32.totalorder %s30, 2
      %s32 = scalar_select %p31, 0, %s30
      %s33 = ssub.s32 %s20, %s32
      %s34 = ssub.s32 %s21, %s28
      %s35 = sor.u32 %s33, %s34
      %p36 = scmp.eq.s32.totalorder %s35, 0
      %s38 = sadd.s32 %s37, 1
      %s39 = scalar_select %p36, %s37, %s38
      %p42 = pneg %p36
      %p43 = scmp.eq.s32.totalorder %s13, 3
      %p44 = por %p42, %p43
      %p45 = scmp.ne.s32.totalorder %s37, %s40
      %p46 = scmp.eq.s32.totalorder %s13, 0
      %p47 = por %p45, %p46
      %p48 = scmp.ne.s32.totalorder %s37, %s40
      %p49 = scmp.eq.s32.totalorder %s18, 3
      %p50 = por %p48, %p49
      %p51 = scmp.ne.s32.totalorder %s40, %s41
      %p52 = scmp.eq.s32.totalorder %s18, 0
      %p53 = por %p51, %p52
      %p54 = scmp.ne.s32.totalorder %s40, %s41
      %p55 = scmp.eq.s32.totalorder %s19, 3
      %p56 = por %p54, %p55
      %p58 = scmp.ne.s32.totalorder %s41, %s57
      %p59 = scmp.eq.s32.totalorder %s19, 0
      %p60 = por %p58, %p59
      %s61 = sadd.s32 %s21, 1
      %s62 = smul.u32 %s61, 4
      %s63 = sadd.s32 %s28, 1
      %s64 = smul.u32 %s63, 4
      %s65 = ssub.s32 %s20, %s32
      %s66 = ssub.s32 %s62, %s64
      %s67 = sor.u32 %s65, %s66
      %p68 = scmp.eq.s32.totalorder %s67, 0
      %s70 = sadd.s32 %s69, 1
      %s71 = scalar_select %p68, %s69, %s70
      %p74 = pneg %p68
      %p75 = scmp.eq.s32.totalorder %s13, 3
      %p76 = por %p74, %p75
      %p77 = scmp.ne.s32.totalorder %s69, %s72
      %p78 = scmp.eq.s32.totalorder %s13, 0
      %p79 = por %p77, %p78
      %p80 = scmp.ne.s32.totalorder %s69, %s72
      %p81 = scmp.eq.s32.totalorder %s18, 3
      %p82 = por %p80, %p81
      %p83 = scmp.ne.s32.totalorder %s72, %s73
      %p84 = scmp.eq.s32.totalorder %s18, 0
      %p85 = por %p83, %p84
      %p86 = scmp.ne.s32.totalorder %s72, %s73
      %p87 = scmp.eq.s32.totalorder %s19, 3
      %p88 = por %p86, %p87
      %p90 = scmp.ne.s32.totalorder %s73, %s89
      %p91 = scmp.eq.s32.totalorder %s19, 0
      %p92 = por %p90, %p91
      %s94 = sadd.s32 %s93, 1
      %p97 = scmp.eq.s32.totalorder %s13, 3
      %p98 = scmp.ne.s32.totalorder %s93, %s95
      %p99 = scmp.eq.s32.totalorder %s13, 0
      %p100 = por %p98, %p99
      %p101 = scmp.ne.s32.totalorder %s93, %s95
      %p102 = scmp.eq.s32.totalorder %s18, 3
      %p103 = por %p101, %p102
      %p104 = scmp.ne.s32.totalorder %s95, %s96
      %p105 = scmp.eq.s32.totalorder %s18, 0
      %p106 = por %p104, %p105
      %p107 = scmp.ne.s32.totalorder %s95, %s96
      %p108 = scmp.eq.s32.totalorder %s19, 3
      %p109 = por %p107, %p108
      %p111 = scmp.ne.s32.totalorder %s96, %s110
      %p112 = scmp.eq.s32.totalorder %s19, 0
      %p113 = por %p111, %p112
      %s115 = sadd.s32 %s114, 1
      %p118 = scmp.eq.s32.totalorder %s13, 3
      %p119 = scmp.ne.s32.totalorder %s114, %s116
      %p120 = scmp.eq.s32.totalorder %s13, 0
      %p121 = por %p119, %p120
      %p122 = scmp.ne.s32.totalorder %s114, %s116
      %p123 = scmp.eq.s32.totalorder %s18, 3
      %p124 = por %p122, %p123
      %p125 = scmp.ne.s32.totalorder %s116, %s117
      %p126 = scmp.eq.s32.totalorder %s18, 0
      %p127 = por %p125, %p126
      %p128 = scmp.ne.s32.totalorder %s116, %s117
      %p129 = scmp.eq.s32.totalorder %s19, 3
      %p130 = por %p128, %p129
      %p132 = scmp.ne.s32.totalorder %s117, %s131
      %p133 = scmp.eq.s32.totalorder %s19, 0
      %p134 = por %p132, %p133
      %s135 = ssub.s32 %s20, %s32
      %s136 = ssub.s32 %s21, %s28
      %s137 = sor.u32 %s135, %s136
      %p138 = scmp.eq.s32.totalorder %s137, 0
      %s140 = sadd.s32 %s139, 1
      %s141 = scalar_select %p138, %s139, %s140
      %p144 = pneg %p138
      %p145 = scmp.eq.s32.totalorder %s13, 3
      %p146 = por %p144, %p145
      %p147 = scmp.ne.s32.totalorder %s139, %s142
      %p148 = scmp.eq.s32.totalorder %s13, 0
      %p149 = por %p147, %p148
      %p150 = scmp.ne.s32.totalorder %s139, %s142
      %p151 = scmp.eq.s32.totalorder %s18, 3
      %p152 = por %p150, %p151
      %p153 = scmp.ne.s32.totalorder %s142, %s143
      %p154 = scmp.eq.s32.totalorder %s18, 0
      %p155 = por %p153, %p154
      %p156 = scmp.ne.s32.totalorder %s142, %s143
      %p157 = scmp.eq.s32.totalorder %s19, 3
      %p158 = por %p156, %p157
      %p160 = scmp.ne.s32.totalorder %s143, %s159
      %p161 = scmp.eq.s32.totalorder %s19, 0
      %p162 = por %p160, %p161
      %p163 = scmp.le.s32.totalorder 1, %s13
      %p164 = scmp.lt.s32.totalorder %s13, 5
      %p165 = pnand %p163, %p164
      %p166 = pneg %p165
      // Predicated region
      $region9: #{tpu_custom_call.1} parent=5 // pred_check
        _
      $region10: #{tpu_custom_call.1} parent=5 // pred_check_branch
        %168 = sbr.rel (%p165) target = $region12
      $region11: #{tpu_custom_call.1} parent=5 // pred_region
        %s169 = ssub.s32 %s13, 1
        // Predicated region
        $region13: #{tpu_custom_call.1} parent=11 // pred_check
          %p170 = pneg %p106
        $region14: #{tpu_custom_call.1} parent=11 // pred_check_branch
          %172 = sbr.rel (%p170) target = $region16
        $region15: #{tpu_custom_call.1} parent=11 // pred_region
          _
        $region16: #{tpu_custom_call.1} parent=11 // pred_fallthru
          _
        // Predicated region
        $region17: #{tpu_custom_call.1} parent=11 // pred_check
          %p173 = pneg %p127
        $region18: #{tpu_custom_call.1} parent=11 // pred_check_branch
          %175 = sbr.rel (%p173) target = $region20
        $region19: #{tpu_custom_call.1} parent=11 // pred_region
          _
        $region20: #{tpu_custom_call.1} parent=11 // pred_fallthru
          _
      $region12: #{tpu_custom_call.1} parent=5 // pred_fallthru
        _
      %p176 = scmp.lt.s32.totalorder %s13, 4
      // Predicated region
      $region21: #{tpu_custom_call.1} parent=5 // pred_check
        %p177 = pneg %p176
      $region22: #{tpu_custom_call.1} parent=5 // pred_check_branch
        %179 = sbr.rel (%p177) target = $region24
      $region23: #{tpu_custom_call.1} parent=5 // pred_region
        // Predicated region
        $region25: #{tpu_custom_call.1} parent=23 // pred_check
          %p180 = pneg %p47
        $region26: #{tpu_custom_call.1} parent=23 // pred_check_branch
          %182 = sbr.rel (%p180) target = $region28
        $region27: #{tpu_custom_call.1} parent=23 // pred_region
          %s183 = smul.u32 8, %s21
          %s184 = ssub.s32 18, %s183
          %p185 = scmp.lt.s32.totalorder %s184, 8
          %s186 = scalar_select %p185, %s184, 8
          %s187 = smul.u32 64, %s186
          %s188 = smul.u32 %s187, 3
          %p189 = scmp.lt.s32.totalorder %s20, 1
          %s190 = scalar_select %p189, %s20, 1
          %p191 = scmp.lt.s32.totalorder %s183, 17
          %s192 = scalar_select %p191, %s183, 17
          %s193 = smul.addr %s192, 3
          %s194 = smul.addr %s190, 54
          %s195 = sadd.s32 %s193, %s194
          %s196 = smul.addr %s195, 4
          %s197 = scalar_lea.vmem %s0, %s196
          %s198 = smul.u32 8, %s21
          %s199 = ssub.s32 18, %s198
          %p200 = scmp.lt.s32.totalorder %s199, 8
          %s201 = scalar_select %p200, %s199, 8
          %s202 = smul.u32 64, %s201
          %s203 = smul.u32 %s202, 3
        $region28: #{tpu_custom_call.1} parent=23 // pred_fallthru
          _
        // Predicated region
        $region29: #{tpu_custom_call.1} parent=23 // pred_check
          %p204 = pneg %p79
        $region30: #{tpu_custom_call.1} parent=23 // pred_check_branch
          %206 = sbr.rel (%p204) target = $region32
        $region31: #{tpu_custom_call.1} parent=23 // pred_region
          %s207 = sadd.s32 %s21, 1
          %s208 = smul.u32 %s207, 4
          %s209 = smul.u32 2, %s208
          %p210 = scmp.lt.s32.totalorder %s20, 1
          %s211 = scalar_select %p210, %s20, 1
          %p212 = scmp.lt.s32.totalorder %s209, 17
          %s213 = scalar_select %p212, %s209, 17
          %s214 = smul.addr %s213, 3
          %s215 = smul.addr %s211, 54
          %s216 = sadd.s32 %s214, %s215
          %s217 = smul.addr %s216, 4
          %s218 = scalar_lea.vmem %s1, %s217
          %s219 = sadd.s32 %s21, 1
          %s220 = smul.u32 %s219, 4
          %s221 = smul.u32 2, %s220
        $region32: #{tpu_custom_call.1} parent=23 // pred_fallthru
          _
      $region24: #{tpu_custom_call.1} parent=5 // pred_fallthru
        _
      %p222 = scmp.le.s32.totalorder 1, %s13
      %p223 = scmp.lt.s32.totalorder %s13, 5
      %p224 = pnand %p222, %p223
      %p225 = pneg %p224
      // Predicated region
      $region33: #{tpu_custom_call.1} parent=5 // pred_check
        _
      $region34: #{tpu_custom_call.1} parent=5 // pred_check_branch
        %227 = sbr.rel (%p224) target = $region36
      $region35: #{tpu_custom_call.1} parent=5 // pred_region
        %s228 = ssub.s32 %s13, 1
        %s229 = smul.u32 8, %s23
        %s230 = ssub.s32 18, %s229
        %p231 = scmp.lt.s32.totalorder %s230, 8
        %s232 = scalar_select %p231, %s230, 8
        %s233 = smul.u32 64, %s232
        %s234 = smul.u32 %s233, 3
        %p235 = scmp.lt.s32.totalorder %s22, 1
        %s236 = scalar_select %p235, %s22, 1
        %p237 = scmp.lt.s32.totalorder %s229, 17
        %s238 = scalar_select %p237, %s229, 17
        %s239 = smul.addr %s238, 3
        %s240 = smul.addr %s236, 54
        %s241 = sadd.s32 %s239, %s240
        %s242 = smul.addr %s241, 4
        %s243 = scalar_lea.vmem %s0, %s242
        %p244 = pneg %p53
        %p245 = pneg %p50
        %s246 = sadd.s32 %s23, 1
        %s247 = smul.u32 %s246, 4
        %s248 = smul.u32 2, %s247
        %p249 = scmp.lt.s32.totalorder %s22, 1
        %s250 = scalar_select %p249, %s22, 1
        %p251 = scmp.lt.s32.totalorder %s248, 17
        %s252 = scalar_select %p251, %s248, 17
        %s253 = smul.addr %s252, 3
        %s254 = smul.addr %s250, 54
        %s255 = sadd.s32 %s253, %s254
        %s256 = smul.addr %s255, 4
        %s257 = scalar_lea.vmem %s1, %s256
        %p258 = pneg %p85
        %p259 = pneg %p82
        %p260 = pneg %p106
        %p261 = pneg %p103
        %p262 = pneg %p127
        %p263 = pneg %p124
        %p264 = pneg %p155
        %p265 = pneg %p152
        %s266 = sand.u32 %s142, 1
        %s267 = scalar_lea.sflag [#allocation3], %s266
        %s268 = sand.u32 %s142, 1
        %s269 = smul.addr %s268, 16
        %s270 = scalar_lea.vmem [#allocation2], %s269
        %s271 = smul.u32 8, %s23
        %s272 = ssub.s32 18, %s271
        %p273 = scmp.lt.s32.totalorder %s272, 8
        %s274 = scalar_select %p273, %s272, 8
        %s275 = smul.u32 64, %s274
        %s276 = smul.u32 %s275, 3
        %p277 = scmp.lt.s32.totalorder %s22, 1
        %s278 = scalar_select %p277, %s22, 1
        %p279 = scmp.lt.s32.totalorder %s271, 17
        %s280 = scalar_select %p279, %s271, 17
        %s281 = smul.addr %s280, 3
        %s282 = smul.addr %s278, 54
        %s283 = sadd.s32 %s281, %s282
        %s284 = smul.addr %s283, 4
        %s285 = scalar_lea.vmem %s0, %s284
        %s286 = smul.u32 8, %s23
        %s287 = ssub.s32 18, %s286
        %p288 = scmp.lt.s32.totalorder %s287, 8
        %s289 = scalar_select %p288, %s287, 8
        %s290 = smul.u32 64, %s289
        %s291 = smul.u32 %s290, 3
        %s292 = sadd.s32 %s23, 1
        %s293 = smul.u32 %s292, 4
        %s294 = smul.u32 2, %s293
        %p295 = scmp.lt.s32.totalorder %s22, 1
        %s296 = scalar_select %p295, %s22, 1
        %p297 = scmp.lt.s32.totalorder %s294, 17
        %s298 = scalar_select %p297, %s294, 17
        %s299 = smul.addr %s298, 3
        %s300 = smul.addr %s296, 54
        %s301 = sadd.s32 %s299, %s300
        %s302 = smul.addr %s301, 4
        %s303 = scalar_lea.vmem %s1, %s302
        %s304 = sadd.s32 %s23, 1
        %s305 = smul.u32 %s304, 4
        %s306 = smul.u32 2, %s305
        %s307 = smul.u32 4, %s23
        %v309 = vld [vmem:[%s285] sm:$0xf]
        %v310 = vld [vmem:[%s285 + $0x4] sm:$0xf]
        %v311 = vld [vmem:[%s285 + $0x8] sm:$0x1]
        %v312 = vld [vmem:[%s285 + $0xc] sm:$0xf]
        %v313 = vld [vmem:[%s285 + $0x10] sm:$0xf]
        %v314 = vld [vmem:[%s285 + $0x14] sm:$0x1]
        %v315 = vld [vmem:[%s285 + $0x18] sm:$0xf]
        %v316 = vld [vmem:[%s285 + $0x1c] sm:$0xf]
        %v317 = vld [vmem:[%s285 + $0x20] sm:$0x1]
        %v318 = vld [vmem:[%s285 + $0x24] sm:$0xf]
        %v319 = vld [vmem:[%s285 + $0x28] sm:$0xf]
        %v320 = vld [vmem:[%s285 + $0x2c] sm:$0x1]
        %v321 = vld [vmem:[%s285 + $0x30] sm:$0xf]
        %v322 = vld [vmem:[%s285 + $0x34] sm:$0xf]
        %v323 = vld [vmem:[%s285 + $0x38] sm:$0x1]
        %v324 = vld [vmem:[%s285 + $0x3c] sm:$0xf]
        %v325 = vld [vmem:[%s285 + $0x40] sm:$0xf]
        %v326 = vld [vmem:[%s285 + $0x44] sm:$0x1]
        %v327 = vld [vmem:[%s285 + $0x48] sm:$0xf]
        %v328 = vld [vmem:[%s285 + $0x4c] sm:$0xf]
        %v329 = vld [vmem:[%s285 + $0x50] sm:$0x1]
        %v330 = vld [vmem:[%s285 + $0x54] sm:$0xf]
        %v331 = vld [vmem:[%s285 + $0x58] sm:$0xf]
        %v332 = vld [vmem:[%s285 + $0x5c] sm:$0x1]
        %v333 = vld [vmem:[%s303] sm:$0xf]
        %v334 = vld [vmem:[%s303 + $0x4] sm:$0xf]
        %v335 = vld [vmem:[%s303 + $0x8] sm:$0x1]
        %v336 = vld [vmem:[%s303 + $0xc] sm:$0xf]
        %v337 = vld [vmem:[%s303 + $0x10] sm:$0xf]
        %v338 = vld [vmem:[%s303 + $0x14] sm:$0x1]
        %v359 = vunpack.c.l.b16 %v309
        %v360 = vunpack.c.l.b16 %v310
        %v361 = vunpack.c.l.b16 %v312
        %v362 = vunpack.c.l.b16 %v313
        %v363 = vunpack.c.l.b16 %v315
        %v364 = vunpack.c.l.b16 %v316
        %v365 = vunpack.c.l.b16 %v318
        %v366 = vunpack.c.l.b16 %v319
        %v367 = vunpack.c.l.b16 %v321
        %v368 = vunpack.c.l.b16 %v322
        %v369 = vunpack.c.l.b16 %v324
        %v370 = vunpack.c.l.b16 %v325
        %v371 = vunpack.c.l.b16 %v327
        %v372 = vunpack.c.l.b16 %v328
        %v373 = vunpack.c.l.b16 %v330
        %v374 = vunpack.c.l.b16 %v331
        %v375 = vunpack.c.l.b16 %v333
        %v376 = vunpack.c.l.b16 %v334
        %v377 = vunpack.c.l.b16 %v336
        %v378 = vunpack.c.l.b16 %v337
        %v379 = vpack.c.b16 %v360, %v359
        %v380 = vpack.c.b16 %v362, %v361
        %v381 = vpack.c.b16 %v364, %v363
        %v382 = vpack.c.b16 %v366, %v365
        %v383 = vpack.c.b16 %v368, %v367
        %v384 = vpack.c.b16 %v370, %v369
        %v385 = vpack.c.b16 %v372, %v371
        %v386 = vpack.c.b16 %v374, %v373
        %v387 = vpack.c.b16 %v376, %v375
        %v388 = vpack.c.b16 %v378, %v377
        %v399 = vunpack.c.l.b16 %v311
        %v400 = vunpack.c.l.b16 %v314
        %v401 = vunpack.c.l.b16 %v317
        %v402 = vunpack.c.l.b16 %v320
        %v403 = vunpack.c.l.b16 %v323
        %v404 = vunpack.c.l.b16 %v326
        %v405 = vunpack.c.l.b16 %v329
        %v406 = vunpack.c.l.b16 %v332
        %v407 = vunpack.c.l.b16 %v335
        %v408 = vunpack.c.l.b16 %v338
        %v409 = vpack.c.b16 %v399, %v399
        %v410 = vpack.c.b16 %v400, %v400
        %v411 = vpack.c.b16 %v401, %v401
        %v412 = vpack.c.b16 %v402, %v402
        %v413 = vpack.c.b16 %v403, %v403
        %v414 = vpack.c.b16 %v404, %v404
        %v415 = vpack.c.b16 %v405, %v405
        %v416 = vpack.c.b16 %v406, %v406
        %v417 = vpack.c.b16 %v407, %v407
        %v418 = vpack.c.b16 %v408, %v408
        %vm419 = vsmask.f32 7424
        %v421 = vshrl.u32 %v379, 16
        %v423 = vshll.u32 %v379, 16
        %v425 = vrot.slane %v423, 1
        %v426 = vor.u32 %v421, %v425
        %v428 = vshll.u32 %v409, 16
        %v430 = vrot.slane %v428, 1
        %v431 = vsel %vm419, %v426, %v430
        %v433 = vshrl.u32 %v380, 16
        %v435 = vshll.u32 %v380, 16
        %v437 = vrot.slane %v435, 1
        %v438 = vor.u32 %v433, %v437
        %v440 = vshll.u32 %v410, 16
        %v442 = vrot.slane %v440, 1
        %v443 = vsel %vm419, %v438, %v442
        %v445 = vshrl.u32 %v381, 16
        %v447 = vshll.u32 %v381, 16
        %v449 = vrot.slane %v447, 1
        %v450 = vor.u32 %v445, %v449
        %v452 = vshll.u32 %v411, 16
        %v454 = vrot.slane %v452, 1
        %v455 = vsel %vm419, %v450, %v454
        %v457 = vshrl.u32 %v382, 16
        %v459 = vshll.u32 %v382, 16
        %v461 = vrot.slane %v459, 1
        %v462 = vor.u32 %v457, %v461
        %v464 = vshll.u32 %v412, 16
        %v466 = vrot.slane %v464, 1
        %v467 = vsel %vm419, %v462, %v466
        %v469 = vshrl.u32 %v383, 16
        %v471 = vshll.u32 %v383, 16
        %v473 = vrot.slane %v471, 1
        %v474 = vor.u32 %v469, %v473
        %v476 = vshll.u32 %v413, 16
        %v478 = vrot.slane %v476, 1
        %v479 = vsel %vm419, %v474, %v478
        %v481 = vshrl.u32 %v384, 16
        %v483 = vshll.u32 %v384, 16
        %v485 = vrot.slane %v483, 1
        %v486 = vor.u32 %v481, %v485
        %v488 = vshll.u32 %v414, 16
        %v490 = vrot.slane %v488, 1
        %v491 = vsel %vm419, %v486, %v490
        %v493 = vshrl.u32 %v385, 16
        %v495 = vshll.u32 %v385, 16
        %v497 = vrot.slane %v495, 1
        %v498 = vor.u32 %v493, %v497
        %v500 = vshll.u32 %v415, 16
        %v502 = vrot.slane %v500, 1
        %v503 = vsel %vm419, %v498, %v502
        %v505 = vshrl.u32 %v386, 16
        %v507 = vshll.u32 %v386, 16
        %v509 = vrot.slane %v507, 1
        %v510 = vor.u32 %v505, %v509
        %v512 = vshll.u32 %v416, 16
        %v514 = vrot.slane %v512, 1
        %v515 = vsel %vm419, %v510, %v514
        %v517 = vshrl.u32 %v387, 16
        %v519 = vshll.u32 %v387, 16
        %v521 = vrot.slane %v519, 1
        %v522 = vor.u32 %v517, %v521
        %v524 = vshll.u32 %v417, 16
        %v526 = vrot.slane %v524, 1
        %v527 = vsel %vm419, %v522, %v526
        %v529 = vshrl.u32 %v388, 16
        %v531 = vshll.u32 %v388, 16
        %v533 = vrot.slane %v531, 1
        %v534 = vor.u32 %v529, %v533
        %v536 = vshll.u32 %v418, 16
        %v538 = vrot.slane %v536, 1
        %v539 = vsel %vm419, %v534, %v538
        %540 = vrot.lane.b32.xlu0 %v431, 4
        %v541 = vpop.permute.xlu0 %540
        %542 = vrot.lane.b32.xlu0 %v443, 4
        %v543 = vpop.permute.xlu0 %542
        %544 = vrot.lane.b32.xlu0 %v455, 4
        %v545 = vpop.permute.xlu0 %544
        %546 = vrot.lane.b32.xlu0 %v467, 4
        %v547 = vpop.permute.xlu0 %546
        %548 = vrot.lane.b32.xlu0 %v479, 4
        %v549 = vpop.permute.xlu0 %548
        %550 = vrot.lane.b32.xlu0 %v491, 4
        %v551 = vpop.permute.xlu0 %550
        %552 = vrot.lane.b32.xlu0 %v503, 4
        %v553 = vpop.permute.xlu0 %552
        %554 = vrot.lane.b32.xlu0 %v515, 4
        %v555 = vpop.permute.xlu0 %554
        %556 = vrot.lane.b32.xlu0 %v527, 4
        %v557 = vpop.permute.xlu0 %556
        %558 = vrot.lane.b32.xlu0 %v539, 4
        %v559 = vpop.permute.xlu0 %558
        %vm560 = vcmask 1046528
        %v561 = vrot.slane %v379, 1
        %v562 = vrot.slane %v409, 1
        %v563 = vsel %vm560, %v561, %v562
        %v564 = vrot.slane %v380, 1
        %v565 = vrot.slane %v410, 1
        %v566 = vsel %vm560, %v564, %v565
        %v567 = vrot.slane %v381, 1
        %v568 = vrot.slane %v411, 1
        %v569 = vsel %vm560, %v567, %v568
        %v570 = vrot.slane %v382, 1
        %v571 = vrot.slane %v412, 1
        %v572 = vsel %vm560, %v570, %v571
        %v573 = vrot.slane %v383, 1
        %v574 = vrot.slane %v413, 1
        %v575 = vsel %vm560, %v573, %v574
        %v576 = vrot.slane %v384, 1
        %v577 = vrot.slane %v414, 1
        %v578 = vsel %vm560, %v576, %v577
        %v579 = vrot.slane %v385, 1
        %v580 = vrot.slane %v415, 1
        %v581 = vsel %vm560, %v579, %v580
        %v582 = vrot.slane %v386, 1
        %v583 = vrot.slane %v416, 1
        %v584 = vsel %vm560, %v582, %v583
        %v585 = vrot.slane %v387, 1
        %v586 = vrot.slane %v417, 1
        %v587 = vsel %vm560, %v585, %v586
        %v588 = vrot.slane %v388, 1
        %v589 = vrot.slane %v418, 1
        %v590 = vsel %vm560, %v588, %v589
        %591 = vrot.lane.b32.xlu0 %v563, 8
        %v592 = vpop.permute.xlu0 %591
        %593 = vrot.lane.b32.xlu0 %v566, 8
        %v594 = vpop.permute.xlu0 %593
        %595 = vrot.lane.b32.xlu0 %v569, 8
        %v596 = vpop.permute.xlu0 %595
        %597 = vrot.lane.b32.xlu0 %v572, 8
        %v598 = vpop.permute.xlu0 %597
        %599 = vrot.lane.b32.xlu0 %v575, 8
        %v600 = vpop.permute.xlu0 %599
        %601 = vrot.lane.b32.xlu0 %v578, 8
        %v602 = vpop.permute.xlu0 %601
        %603 = vrot.lane.b32.xlu0 %v581, 8
        %v604 = vpop.permute.xlu0 %603
        %605 = vrot.lane.b32.xlu0 %v584, 8
        %v606 = vpop.permute.xlu0 %605
        %607 = vrot.lane.b32.xlu0 %v587, 8
        %v608 = vpop.permute.xlu0 %607
        %609 = vrot.lane.b32.xlu0 %v590, 8
        %v610 = vpop.permute.xlu0 %609
        %vm611 = vcmask 31744
        %v613 = vsel %vm611, %v379, %v541
        %v615 = vsel %vm611, %v380, %v543
        %v617 = vsel %vm611, %v381, %v545
        %v619 = vsel %vm611, %v382, %v547
        %v621 = vsel %vm611, %v383, %v549
        %v623 = vsel %vm611, %v384, %v551
        %v625 = vsel %vm611, %v385, %v553
        %v627 = vsel %vm611, %v386, %v555
        %v629 = vsel %vm611, %v387, %v557
        %v631 = vsel %vm611, %v388, %v559
        %vm632 = vcmask 64512
        %v634 = vsel %vm632, %v613, %v592
        %v636 = vsel %vm632, %v615, %v594
        %v638 = vsel %vm632, %v617, %v596
        %v640 = vsel %vm632, %v619, %v598
        %v642 = vsel %vm632, %v621, %v600
        %v644 = vsel %vm632, %v623, %v602
        %v646 = vsel %vm632, %v625, %v604
        %v648 = vsel %vm632, %v627, %v606
        %v650 = vsel %vm632, %v629, %v608
        %v652 = vsel %vm632, %v631, %v610
        %661 = vrot.lane.b32.xlu0 %v636, 12
        %v662 = vpop.permute.xlu0 %661
        %663 = vrot.lane.b32.xlu0 %v638, 12
        %v664 = vpop.permute.xlu0 %663
        %665 = vrot.lane.b32.xlu0 %v640, 12
        %v666 = vpop.permute.xlu0 %665
        %667 = vrot.lane.b32.xlu0 %v642, 12
        %v668 = vpop.permute.xlu0 %667
        %669 = vrot.lane.b32.xlu0 %v644, 12
        %v670 = vpop.permute.xlu0 %669
        %671 = vrot.lane.b32.xlu0 %v646, 12
        %v672 = vpop.permute.xlu0 %671
        %673 = vrot.lane.b32.xlu0 %v648, 12
        %v674 = vpop.permute.xlu0 %673
        %675 = vrot.lane.b32.xlu0 %v650, 12
        %v676 = vpop.permute.xlu0 %675
        %678 = vrot.lane.b32.xlu0 %v638, 24
        %v679 = vpop.permute.xlu0 %678
        %680 = vrot.lane.b32.xlu0 %v640, 24
        %v681 = vpop.permute.xlu0 %680
        %682 = vrot.lane.b32.xlu0 %v642, 24
        %v683 = vpop.permute.xlu0 %682
        %684 = vrot.lane.b32.xlu0 %v644, 24
        %v685 = vpop.permute.xlu0 %684
        %686 = vrot.lane.b32.xlu0 %v646, 24
        %v687 = vpop.permute.xlu0 %686
        %688 = vrot.lane.b32.xlu0 %v648, 24
        %v689 = vpop.permute.xlu0 %688
        %690 = vrot.lane.b32.xlu0 %v650, 24
        %v691 = vpop.permute.xlu0 %690
        %692 = vrot.lane.b32.xlu0 %v652, 24
        %v693 = vpop.permute.xlu0 %692
        %vm694 = vcmask 97280
        %v696 = vsel %vm694, %v634, %v662
        %v698 = vsel %vm694, %v636, %v664
        %v700 = vsel %vm694, %v638, %v666
        %v702 = vsel %vm694, %v640, %v668
        %v704 = vsel %vm694, %v642, %v670
        %v706 = vsel %vm694, %v644, %v672
        %v708 = vsel %vm694, %v646, %v674
        %v710 = vsel %vm694, %v648, %v676
        %vm711 = vcmask 195584
        %v713 = vsel %vm711, %v696, %v679
        %v715 = vsel %vm711, %v698, %v681
        %v717 = vsel %vm711, %v700, %v683
        %v719 = vsel %vm711, %v702, %v685
        %v721 = vsel %vm711, %v704, %v687
        %v723 = vsel %vm711, %v706, %v689
        %v725 = vsel %vm711, %v708, %v691
        %v727 = vsel %vm711, %v710, %v693
        %v728 = vld [vmem:[%s2] sm:$0xf]
        %v729 = vld [vmem:[%s2 + $0x4] sm:$0xf]
        %v730 = vld [vmem:[%s2 + $0x8] sm:$0xf]
        %v731 = vld [vmem:[%s2 + $0xc] sm:$0xf]
        %v732 = vld [vmem:[%s2 + $0x10] sm:$0x3]
        %v733 = vld [vmem:[%s3] sm:$0x1]
        %v735 = vlaneseq
        %v736 = vshrl.u32 %v735, 7
        %v737 = vsub.s32 0, %v736
        %v738 = vrot.slane %v733, %v737
        %v745 = vunpack.c.l.b16 %v728
        %v746 = vunpack.c.l.b16 %v729
        %v747 = vunpack.c.l.b16 %v730
        %v748 = vunpack.c.l.b16 %v731
        %v749 = vunpack.c.l.b16 %v732
        %v750 = vpack.c.b16 %v746, %v745
        %v751 = vpack.c.b16 %v748, %v747
        %v752 = vpack.c.b16 %v749, %v749
        %vm755 = vcmask 293888
        %v756 = vsel %vm755, %v713, 0
        %v758 = vsel %vm755, %v715, 0
        %v760 = vsel %vm755, %v717, 0
        %v762 = vsel %vm755, %v719, 0
        %v764 = vsel %vm755, %v721, 0
        %v766 = vsel %vm755, %v723, 0
        %v768 = vsel %vm755, %v725, 0
        %v770 = vsel %vm755, %v727, 0
        %vm772 = vcmask 1041408
        %v774 = vsel %vm772, %v752, 0
        %776 = vmatprep.subr.bf16.mxu0 0
        %777 = vmatpush1.bf16.msra.mxu0 %v750
        %778 = vmatprep.subr.bf16.mxu0 0
        %779 = vmatpush1.bf16.msra.mxu0 %v751
        %780 = vmatprep.subr.bf16.mxu0 0
        %781 = vmatpush1.bf16.msra.mxu0 %v774
        %782 = vmatprep.subr.bf16.mxu0 0
        %783 = vmatpush1.bf16.msra.mxu0 0
        %784 = vmatprep.subr.bf16.mxu0 0
        %785 = vmatpush1.bf16.msra.mxu0 0
        %786 = vmatprep.subr.bf16.mxu0 0
        %787 = vmatpush1.bf16.msra.mxu0 0
        %788 = vmatprep.subr.bf16.mxu0 0
        %789 = vmatpush1.bf16.msra.mxu0 0
        %790 = vmatprep.subr.bf16.mxu0 0
        %791 = vmatpush1.bf16.msra.mxu0 0
        %792 = vmatprep.subr.bf16.mxu0 0
        %793 = vmatpush1.bf16.msra.mxu0 0
        %794 = vmatprep.subr.bf16.mxu0 0
        %795 = vmatpush1.bf16.msra.mxu0 0
        %796 = vmatprep.subr.bf16.mxu0 0
        %797 = vmatpush1.bf16.msra.mxu0 0
        %798 = vmatprep.subr.bf16.mxu0 0
        %799 = vmatpush1.bf16.msra.mxu0 0
        %800 = vmatprep.subr.bf16.mxu0 0
        %801 = vmatpush1.bf16.msra.mxu0 0
        %802 = vmatprep.subr.bf16.mxu0 0
        %803 = vmatpush1.bf16.msra.mxu0 0
        %804 = vmatprep.subr.bf16.mxu0 0
        %805 = vmatpush1.bf16.msra.mxu0 0
        %806 = vmatprep.subr.bf16.mxu0 0
        %807 = vmatpush1.bf16.msra.mxu0 0
        %808 = vmatprep.mubr.bf16.mxu0 0
        %809 = vmatmul.mubr.bf16.gmra.mrb[0].mxu0 %v756
        %v810 = vpop.f32.mrb[0].mxu0
        %v811 = vadd.f32 %v738, %v810
        %v812 = vpop.f32.mrb[0].mxu0
        %v813 = vpop.f32.mrb[0].mxu0
        %v814 = vadd.f32 %v738, %v813
        %v815 = vpop.f32.mrb[0].mxu0
        %816 = vmatprep.mubr.bf16.mxu0 0
        %817 = vmatmul.mubr.bf16.gmra.mrb[0].mxu0 %v758
        %v818 = vpop.f32.mrb[0].mxu0
        %v819 = vadd.f32 %v738, %v818
        %v820 = vpop.f32.mrb[0].mxu0
        %v821 = vpop.f32.mrb[0].mxu0
        %v822 = vadd.f32 %v738, %v821
        %v823 = vpop.f32.mrb[0].mxu0
        %824 = vmatprep.mubr.bf16.mxu0 0
        %825 = vmatmul.mubr.bf16.gmra.mrb[0].mxu0 %v760
        %v826 = vpop.f32.mrb[0].mxu0
        %v827 = vadd.f32 %v738, %v826
        %v828 = vpop.f32.mrb[0].mxu0
        %v829 = vpop.f32.mrb[0].mxu0
        %v830 = vadd.f32 %v738, %v829
        %v831 = vpop.f32.mrb[0].mxu0
        %832 = vmatprep.mubr.bf16.mxu0 0
        %833 = vmatmul.mubr.bf16.gmra.mrb[0].mxu0 %v762
        %v834 = vpop.f32.mrb[0].mxu0
        %v835 = vadd.f32 %v738, %v834
        %v836 = vpop.f32.mrb[0].mxu0
        %v837 = vpop.f32.mrb[0].mxu0
        %v838 = vadd.f32 %v738, %v837
        %v839 = vpop.f32.mrb[0].mxu0
        %840 = vmatprep.mubr.bf16.mxu0 0
        %841 = vmatmul.mubr.bf16.gmra.mrb[0].mxu0 %v764
        %v842 = vpop.f32.mrb[0].mxu0
        %v843 = vadd.f32 %v738, %v842
        %v844 = vpop.f32.mrb[0].mxu0
        %v845 = vpop.f32.mrb[0].mxu0
        %v846 = vadd.f32 %v738, %v845
        %v847 = vpop.f32.mrb[0].mxu0
        %848 = vmatprep.mubr.bf16.mxu0 0
        %849 = vmatmul.mubr.bf16.gmra.mrb[0].mxu0 %v766
        %v850 = vpop.f32.mrb[0].mxu0
        %v851 = vadd.f32 %v738, %v850
        %v852 = vpop.f32.mrb[0].mxu0
        %v853 = vpop.f32.mrb[0].mxu0
        %v854 = vadd.f32 %v738, %v853
        %v855 = vpop.f32.mrb[0].mxu0
        %856 = vmatprep.mubr.bf16.mxu0 0
        %857 = vmatmul.mubr.bf16.gmra.mrb[0].mxu0 %v768
        %v858 = vpop.f32.mrb[0].mxu0
        %v859 = vadd.f32 %v738, %v858
        %v860 = vpop.f32.mrb[0].mxu0
        %v861 = vpop.f32.mrb[0].mxu0
        %v862 = vadd.f32 %v738, %v861
        %v863 = vpop.f32.mrb[0].mxu0
        %864 = vmatprep.mubr.bf16.mxu0 0
        %865 = vmatmul.mubr.bf16.gmra.mrb[0].mxu0 %v770
        %v866 = vpop.f32.mrb[0].mxu0
        %v867 = vadd.f32 %v738, %v866
        %v868 = vpop.f32.mrb[0].mxu0
        %v869 = vpop.f32.mrb[0].mxu0
        %v870 = vadd.f32 %v738, %v869
        %v871 = vpop.f32.mrb[0].mxu0
        %872 = vdwg.mxu0
        %vm873 = vcmp.gt.f32.partialorder %v811, 0.0
        %vm874 = vcmp.gt.f32.partialorder %v814, 0.0
        %vm875 = vcmp.gt.f32.partialorder %v819, 0.0
        %vm876 = vcmp.gt.f32.partialorder %v822, 0.0
        %vm877 = vcmp.gt.f32.partialorder %v827, 0.0
        %vm878 = vcmp.gt.f32.partialorder %v830, 0.0
        %vm879 = vcmp.gt.f32.partialorder %v835, 0.0
        %vm880 = vcmp.gt.f32.partialorder %v838, 0.0
        %vm881 = vcmp.gt.f32.partialorder %v843, 0.0
        %vm882 = vcmp.gt.f32.partialorder %v846, 0.0
        %vm883 = vcmp.gt.f32.partialorder %v851, 0.0
        %vm884 = vcmp.gt.f32.partialorder %v854, 0.0
        %vm885 = vcmp.gt.f32.partialorder %v859, 0.0
        %vm886 = vcmp.gt.f32.partialorder %v862, 0.0
        %vm887 = vcmp.gt.f32.partialorder %v867, 0.0
        %vm888 = vcmp.gt.f32.partialorder %v870, 0.0
        %v889 = vmul.f32 %v811, 0.1
        %v890 = vmul.f32 %v814, 0.1
        %v891 = vmul.f32 %v819, 0.1
        %v892 = vmul.f32 %v822, 0.1
        %v893 = vmul.f32 %v827, 0.1
        %v894 = vmul.f32 %v830, 0.1
        %v895 = vmul.f32 %v835, 0.1
        %v896 = vmul.f32 %v838, 0.1
        %v897 = vmul.f32 %v843, 0.1
        %v898 = vmul.f32 %v846, 0.1
        %v899 = vmul.f32 %v851, 0.1
        %v900 = vmul.f32 %v854, 0.1
        %v901 = vmul.f32 %v859, 0.1
        %v902 = vmul.f32 %v862, 0.1
        %v903 = vmul.f32 %v867, 0.1
        %v904 = vmul.f32 %v870, 0.1
        %v905 = vsel %vm873, %v811, %v889
        %v906 = vsel %vm874, %v814, %v890
        %v907 = vsel %vm875, %v819, %v891
        %v908 = vsel %vm876, %v822, %v892
        %v909 = vsel %vm877, %v827, %v893
        %v910 = vsel %vm878, %v830, %v894
        %v911 = vsel %vm879, %v835, %v895
        %v912 = vsel %vm880, %v838, %v896
        %v913 = vsel %vm881, %v843, %v897
        %v914 = vsel %vm882, %v846, %v898
        %v915 = vsel %vm883, %v851, %v899
        %v916 = vsel %vm884, %v854, %v900
        %v917 = vsel %vm885, %v859, %v901
        %v918 = vsel %vm886, %v862, %v902
        %v919 = vsel %vm887, %v867, %v903
        %v920 = vsel %vm888, %v870, %v904
        %v921 = vmax.f32 %v905, %v907
        %v922 = vmax.f32 %v906, %v908
        %v923 = vmax.f32 %v909, %v911
        %v924 = vmax.f32 %v910, %v912
        %v925 = vmax.f32 %v913, %v915
        %v926 = vmax.f32 %v914, %v916
        %v927 = vmax.f32 %v917, %v919
        %v928 = vmax.f32 %v918, %v920
        %v937 = vcombine.high %v921, %v921
        %v939 = vunpack.c.l.s4 1983009808
        %v940 = vunpack.c.0.s8 %v939
        %v941 = vlaneseq
        %v942 = vshrl.u32 %v941, 7
        %v943 = vsub.s32 %v940, %v942
        %v944 = vrot.slane %v921, %v943
        %v946 = vunpack.c.l.s4 1983009808
        %v947 = vunpack.c.0.s8 %v946
        %v948 = vlaneseq
        %v949 = vshrl.u32 %v948, 7
        %v950 = vsub.s32 %v947, %v949
        %v951 = vrot.slane %v937, %v950
        %v952 = vcombine.high %v944, %v944
        %v953 = vcombine.high %v951, %v951
        %v954 = vcombine.high %v922, %v922
        %v956 = vunpack.c.l.s4 1983009808
        %v957 = vunpack.c.0.s8 %v956
        %v958 = vlaneseq
        %v959 = vshrl.u32 %v958, 7
        %v960 = vsub.s32 %v957, %v959
        %v961 = vrot.slane %v922, %v960
        %v963 = vunpack.c.l.s4 1983009808
        %v964 = vunpack.c.0.s8 %v963
        %v965 = vlaneseq
        %v966 = vshrl.u32 %v965, 7
        %v967 = vsub.s32 %v964, %v966
        %v968 = vrot.slane %v954, %v967
        %v969 = vcombine.high %v961, %v961
        %v970 = vcombine.high %v968, %v968
        %v971 = vcombine.high %v923, %v923
        %v973 = vunpack.c.l.s4 1983009808
        %v974 = vunpack.c.0.s8 %v973
        %v975 = vlaneseq
        %v976 = vshrl.u32 %v975, 7
        %v977 = vsub.s32 %v974, %v976
        %v978 = vrot.slane %v923, %v977
        %v980 = vunpack.c.l.s4 1983009808
        %v981 = vunpack.c.0.s8 %v980
        %v982 = vlaneseq
        %v983 = vshrl.u32 %v982, 7
        %v984 = vsub.s32 %v981, %v983
        %v985 = vrot.slane %v971, %v984
        %v986 = vcombine.high %v978, %v978
        %v987 = vcombine.high %v985, %v985
        %v988 = vcombine.high %v924, %v924
        %v990 = vunpack.c.l.s4 1983009808
        %v991 = vunpack.c.0.s8 %v990
        %v992 = vlaneseq
        %v993 = vshrl.u32 %v992, 7
        %v994 = vsub.s32 %v991, %v993
        %v995 = vrot.slane %v924, %v994
        %v997 = vunpack.c.l.s4 1983009808
        %v998 = vunpack.c.0.s8 %v997
        %v999 = vlaneseq
        %v1000 = vshrl.u32 %v999, 7
        %v1001 = vsub.s32 %v998, %v1000
        %v1002 = vrot.slane %v988, %v1001
        %v1003 = vcombine.high %v995, %v995
        %v1004 = vcombine.high %v1002, %v1002
        %v1005 = vcombine.high %v925, %v925
        %v1007 = vunpack.c.l.s4 1983009808
        %v1008 = vunpack.c.0.s8 %v1007
        %v1009 = vlaneseq
        %v1010 = vshrl.u32 %v1009, 7
        %v1011 = vsub.s32 %v1008, %v1010
        %v1012 = vrot.slane %v925, %v1011
        %v1014 = vunpack.c.l.s4 1983009808
        %v1015 = vunpack.c.0.s8 %v1014
        %v1016 = vlaneseq
        %v1017 = vshrl.u32 %v1016, 7
        %v1018 = vsub.s32 %v1015, %v1017
        %v1019 = vrot.slane %v1005, %v1018
        %v1020 = vcombine.high %v1012, %v1012
        %v1021 = vcombine.high %v1019, %v1019
        %v1022 = vcombine.high %v926, %v926
        %v1024 = vunpack.c.l.s4 1983009808
        %v1025 = vunpack.c.0.s8 %v1024
        %v1026 = vlaneseq
        %v1027 = vshrl.u32 %v1026, 7
        %v1028 = vsub.s32 %v1025, %v1027
        %v1029 = vrot.slane %v926, %v1028
        %v1031 = vunpack.c.l.s4 1983009808
        %v1032 = vunpack.c.0.s8 %v1031
        %v1033 = vlaneseq
        %v1034 = vshrl.u32 %v1033, 7
        %v1035 = vsub.s32 %v1032, %v1034
        %v1036 = vrot.slane %v1022, %v1035
        %v1037 = vcombine.high %v1029, %v1029
        %v1038 = vcombine.high %v1036, %v1036
        %v1039 = vcombine.high %v927, %v927
        %v1041 = vunpack.c.l.s4 1983009808
        %v1042 = vunpack.c.0.s8 %v1041
        %v1043 = vlaneseq
        %v1044 = vshrl.u32 %v1043, 7
        %v1045 = vsub.s32 %v1042, %v1044
        %v1046 = vrot.slane %v927, %v1045
        %v1048 = vunpack.c.l.s4 1983009808
        %v1049 = vunpack.c.0.s8 %v1048
        %v1050 = vlaneseq
        %v1051 = vshrl.u32 %v1050, 7
        %v1052 = vsub.s32 %v1049, %v1051
        %v1053 = vrot.slane %v1039, %v1052
        %v1054 = vcombine.high %v1046, %v1046
        %v1055 = vcombine.high %v1053, %v1053
        %v1056 = vcombine.high %v928, %v928
        %v1058 = vunpack.c.l.s4 1983009808
        %v1059 = vunpack.c.0.s8 %v1058
        %v1060 = vlaneseq
        %v1061 = vshrl.u32 %v1060, 7
        %v1062 = vsub.s32 %v1059, %v1061
        %v1063 = vrot.slane %v928, %v1062
        %v1065 = vunpack.c.l.s4 1983009808
        %v1066 = vunpack.c.0.s8 %v1065
        %v1067 = vlaneseq
        %v1068 = vshrl.u32 %v1067, 7
        %v1069 = vsub.s32 %v1066, %v1068
        %v1070 = vrot.slane %v1056, %v1069
        %v1071 = vcombine.high %v1063, %v1063
        %v1072 = vcombine.high %v1070, %v1070
        %vm1105 = vcmask 58368
        %v1106 = vsel %vm1105, %v944, -inf
        %v1107 = vrot.slane %v1106, 4
        %v1108 = vmax.f32 %v1106, %v1107
        %v1109 = vrot.slane %v1108, 2
        %v1110 = vmax.f32 %v1108, %v1109
        %v1111 = vrot.slane %v1110, 1
        %v1112 = vmax.f32 %v1110, %v1111
        %v1113 = vsel %vm1105, %v952, -inf
        %v1114 = vrot.slane %v1113, 4
        %v1115 = vmax.f32 %v1113, %v1114
        %v1116 = vrot.slane %v1115, 2
        %v1117 = vmax.f32 %v1115, %v1116
        %v1118 = vrot.slane %v1117, 1
        %v1119 = vmax.f32 %v1117, %v1118
        %v1120 = vsel %vm1105, %v951, -inf
        %v1121 = vrot.slane %v1120, 4
        %v1122 = vmax.f32 %v1120, %v1121
        %v1123 = vrot.slane %v1122, 2
        %v1124 = vmax.f32 %v1122, %v1123
        %v1125 = vrot.slane %v1124, 1
        %v1126 = vmax.f32 %v1124, %v1125
        %v1127 = vsel %vm1105, %v953, -inf
        %v1128 = vrot.slane %v1127, 4
        %v1129 = vmax.f32 %v1127, %v1128
        %v1130 = vrot.slane %v1129, 2
        %v1131 = vmax.f32 %v1129, %v1130
        %v1132 = vrot.slane %v1131, 1
        %v1133 = vmax.f32 %v1131, %v1132
        %v1134 = vsel %vm1105, %v961, -inf
        %v1135 = vrot.slane %v1134, 4
        %v1136 = vmax.f32 %v1134, %v1135
        %v1137 = vrot.slane %v1136, 2
        %v1138 = vmax.f32 %v1136, %v1137
        %v1139 = vrot.slane %v1138, 1
        %v1140 = vmax.f32 %v1138, %v1139
        %v1141 = vsel %vm1105, %v969, -inf
        %v1142 = vrot.slane %v1141, 4
        %v1143 = vmax.f32 %v1141, %v1142
        %v1144 = vrot.slane %v1143, 2
        %v1145 = vmax.f32 %v1143, %v1144
        %v1146 = vrot.slane %v1145, 1
        %v1147 = vmax.f32 %v1145, %v1146
        %v1148 = vsel %vm1105, %v968, -inf
        %v1149 = vrot.slane %v1148, 4
        %v1150 = vmax.f32 %v1148, %v1149
        %v1151 = vrot.slane %v1150, 2
        %v1152 = vmax.f32 %v1150, %v1151
        %v1153 = vrot.slane %v1152, 1
        %v1154 = vmax.f32 %v1152, %v1153
        %v1155 = vsel %vm1105, %v970, -inf
        %v1156 = vrot.slane %v1155, 4
        %v1157 = vmax.f32 %v1155, %v1156
        %v1158 = vrot.slane %v1157, 2
        %v1159 = vmax.f32 %v1157, %v1158
        %v1160 = vrot.slane %v1159, 1
        %v1161 = vmax.f32 %v1159, %v1160
        %v1162 = vsel %vm1105, %v978, -inf
        %v1163 = vrot.slane %v1162, 4
        %v1164 = vmax.f32 %v1162, %v1163
        %v1165 = vrot.slane %v1164, 2
        %v1166 = vmax.f32 %v1164, %v1165
        %v1167 = vrot.slane %v1166, 1
        %v1168 = vmax.f32 %v1166, %v1167
        %v1169 = vsel %vm1105, %v986, -inf
        %v1170 = vrot.slane %v1169, 4
        %v1171 = vmax.f32 %v1169, %v1170
        %v1172 = vrot.slane %v1171, 2
        %v1173 = vmax.f32 %v1171, %v1172
        %v1174 = vrot.slane %v1173, 1
        %v1175 = vmax.f32 %v1173, %v1174
        %v1176 = vsel %vm1105, %v985, -inf
        %v1177 = vrot.slane %v1176, 4
        %v1178 = vmax.f32 %v1176, %v1177
        %v1179 = vrot.slane %v1178, 2
        %v1180 = vmax.f32 %v1178, %v1179
        %v1181 = vrot.slane %v1180, 1
        %v1182 = vmax.f32 %v1180, %v1181
        %v1183 = vsel %vm1105, %v987, -inf
        %v1184 = vrot.slane %v1183, 4
        %v1185 = vmax.f32 %v1183, %v1184
        %v1186 = vrot.slane %v1185, 2
        %v1187 = vmax.f32 %v1185, %v1186
        %v1188 = vrot.slane %v1187, 1
        %v1189 = vmax.f32 %v1187, %v1188
        %v1190 = vsel %vm1105, %v995, -inf
        %v1191 = vrot.slane %v1190, 4
        %v1192 = vmax.f32 %v1190, %v1191
        %v1193 = vrot.slane %v1192, 2
        %v1194 = vmax.f32 %v1192, %v1193
        %v1195 = vrot.slane %v1194, 1
        %v1196 = vmax.f32 %v1194, %v1195
        %v1197 = vsel %vm1105, %v1003, -inf
        %v1198 = vrot.slane %v1197, 4
        %v1199 = vmax.f32 %v1197, %v1198
        %v1200 = vrot.slane %v1199, 2
        %v1201 = vmax.f32 %v1199, %v1200
        %v1202 = vrot.slane %v1201, 1
        %v1203 = vmax.f32 %v1201, %v1202
        %v1204 = vsel %vm1105, %v1002, -inf
        %v1205 = vrot.slane %v1204, 4
        %v1206 = vmax.f32 %v1204, %v1205
        %v1207 = vrot.slane %v1206, 2
        %v1208 = vmax.f32 %v1206, %v1207
        %v1209 = vrot.slane %v1208, 1
        %v1210 = vmax.f32 %v1208, %v1209
        %v1211 = vsel %vm1105, %v1004, -inf
        %v1212 = vrot.slane %v1211, 4
        %v1213 = vmax.f32 %v1211, %v1212
        %v1214 = vrot.slane %v1213, 2
        %v1215 = vmax.f32 %v1213, %v1214
        %v1216 = vrot.slane %v1215, 1
        %v1217 = vmax.f32 %v1215, %v1216
        %v1218 = vsel %vm1105, %v1012, -inf
        %v1219 = vrot.slane %v1218, 4
        %v1220 = vmax.f32 %v1218, %v1219
        %v1221 = vrot.slane %v1220, 2
        %v1222 = vmax.f32 %v1220, %v1221
        %v1223 = vrot.slane %v1222, 1
        %v1224 = vmax.f32 %v1222, %v1223
        %v1225 = vsel %vm1105, %v1020, -inf
        %v1226 = vrot.slane %v1225, 4
        %v1227 = vmax.f32 %v1225, %v1226
        %v1228 = vrot.slane %v1227, 2
        %v1229 = vmax.f32 %v1227, %v1228
        %v1230 = vrot.slane %v1229, 1
        %v1231 = vmax.f32 %v1229, %v1230
        %v1232 = vsel %vm1105, %v1019, -inf
        %v1233 = vrot.slane %v1232, 4
        %v1234 = vmax.f32 %v1232, %v1233
        %v1235 = vrot.slane %v1234, 2
        %v1236 = vmax.f32 %v1234, %v1235
        %v1237 = vrot.slane %v1236, 1
        %v1238 = vmax.f32 %v1236, %v1237
        %v1239 = vsel %vm1105, %v1021, -inf
        %v1240 = vrot.slane %v1239, 4
        %v1241 = vmax.f32 %v1239, %v1240
        %v1242 = vrot.slane %v1241, 2
        %v1243 = vmax.f32 %v1241, %v1242
        %v1244 = vrot.slane %v1243, 1
        %v1245 = vmax.f32 %v1243, %v1244
        %v1246 = vsel %vm1105, %v1029, -inf
        %v1247 = vrot.slane %v1246, 4
        %v1248 = vmax.f32 %v1246, %v1247
        %v1249 = vrot.slane %v1248, 2
        %v1250 = vmax.f32 %v1248, %v1249
        %v1251 = vrot.slane %v1250, 1
        %v1252 = vmax.f32 %v1250, %v1251
        %v1253 = vsel %vm1105, %v1037, -inf
        %v1254 = vrot.slane %v1253, 4
        %v1255 = vmax.f32 %v1253, %v1254
        %v1256 = vrot.slane %v1255, 2
        %v1257 = vmax.f32 %v1255, %v1256
        %v1258 = vrot.slane %v1257, 1
        %v1259 = vmax.f32 %v1257, %v1258
        %v1260 = vsel %vm1105, %v1036, -inf
        %v1261 = vrot.slane %v1260, 4
        %v1262 = vmax.f32 %v1260, %v1261
        %v1263 = vrot.slane %v1262, 2
        %v1264 = vmax.f32 %v1262, %v1263
        %v1265 = vrot.slane %v1264, 1
        %v1266 = vmax.f32 %v1264, %v1265
        %v1267 = vsel %vm1105, %v1038, -inf
        %v1268 = vrot.slane %v1267, 4
        %v1269 = vmax.f32 %v1267, %v1268
        %v1270 = vrot.slane %v1269, 2
        %v1271 = vmax.f32 %v1269, %v1270
        %v1272 = vrot.slane %v1271, 1
        %v1273 = vmax.f32 %v1271, %v1272
        %v1274 = vsel %vm1105, %v1046, -inf
        %v1275 = vrot.slane %v1274, 4
        %v1276 = vmax.f32 %v1274, %v1275
        %v1277 = vrot.slane %v1276, 2
        %v1278 = vmax.f32 %v1276, %v1277
        %v1279 = vrot.slane %v1278, 1
        %v1280 = vmax.f32 %v1278, %v1279
        %v1281 = vsel %vm1105, %v1054, -inf
        %v1282 = vrot.slane %v1281, 4
        %v1283 = vmax.f32 %v1281, %v1282
        %v1284 = vrot.slane %v1283, 2
        %v1285 = vmax.f32 %v1283, %v1284
        %v1286 = vrot.slane %v1285, 1
        %v1287 = vmax.f32 %v1285, %v1286
        %v1288 = vsel %vm1105, %v1053, -inf
        %v1289 = vrot.slane %v1288, 4
        %v1290 = vmax.f32 %v1288, %v1289
        %v1291 = vrot.slane %v1290, 2
        %v1292 = vmax.f32 %v1290, %v1291
        %v1293 = vrot.slane %v1292, 1
        %v1294 = vmax.f32 %v1292, %v1293
        %v1295 = vsel %vm1105, %v1055, -inf
        %v1296 = vrot.slane %v1295, 4
        %v1297 = vmax.f32 %v1295, %v1296
        %v1298 = vrot.slane %v1297, 2
        %v1299 = vmax.f32 %v1297, %v1298
        %v1300 = vrot.slane %v1299, 1
        %v1301 = vmax.f32 %v1299, %v1300
        %v1302 = vsel %vm1105, %v1063, -inf
        %v1303 = vrot.slane %v1302, 4
        %v1304 = vmax.f32 %v1302, %v1303
        %v1305 = vrot.slane %v1304, 2
        %v1306 = vmax.f32 %v1304, %v1305
        %v1307 = vrot.slane %v1306, 1
        %v1308 = vmax.f32 %v1306, %v1307
        %v1309 = vsel %vm1105, %v1071, -inf
        %v1310 = vrot.slane %v1309, 4
        %v1311 = vmax.f32 %v1309, %v1310
        %v1312 = vrot.slane %v1311, 2
        %v1313 = vmax.f32 %v1311, %v1312
        %v1314 = vrot.slane %v1313, 1
        %v1315 = vmax.f32 %v1313, %v1314
        %v1316 = vsel %vm1105, %v1070, -inf
        %v1317 = vrot.slane %v1316, 4
        %v1318 = vmax.f32 %v1316, %v1317
        %v1319 = vrot.slane %v1318, 2
        %v1320 = vmax.f32 %v1318, %v1319
        %v1321 = vrot.slane %v1320, 1
        %v1322 = vmax.f32 %v1320, %v1321
        %v1323 = vsel %vm1105, %v1072, -inf
        %v1324 = vrot.slane %v1323, 4
        %v1325 = vmax.f32 %v1323, %v1324
        %v1326 = vrot.slane %v1325, 2
        %v1327 = vmax.f32 %v1325, %v1326
        %v1328 = vrot.slane %v1327, 1
        %v1329 = vmax.f32 %v1327, %v1328
        %v1330 = vpack.c.bf16 %v1112, %v1112
        %v1331 = vpack.c.bf16 %v1119, %v1119
        %v1332 = vpack.c.bf16 %v1126, %v1126
        %v1333 = vpack.c.bf16 %v1133, %v1133
        %v1334 = vpack.c.bf16 %v1140, %v1140
        %v1335 = vpack.c.bf16 %v1147, %v1147
        %v1336 = vpack.c.bf16 %v1154, %v1154
        %v1337 = vpack.c.bf16 %v1161, %v1161
        %v1338 = vpack.c.bf16 %v1168, %v1168
        %v1339 = vpack.c.bf16 %v1175, %v1175
        %v1340 = vpack.c.bf16 %v1182, %v1182
        %v1341 = vpack.c.bf16 %v1189, %v1189
        %v1342 = vpack.c.bf16 %v1196, %v1196
        %v1343 = vpack.c.bf16 %v1203, %v1203
        %v1344 = vpack.c.bf16 %v1210, %v1210
        %v1345 = vpack.c.bf16 %v1217, %v1217
        %v1346 = vpack.c.bf16 %v1224, %v1224
        %v1347 = vpack.c.bf16 %v1231, %v1231
        %v1348 = vpack.c.bf16 %v1238, %v1238
        %v1349 = vpack.c.bf16 %v1245, %v1245
        %v1350 = vpack.c.bf16 %v1252, %v1252
        %v1351 = vpack.c.bf16 %v1259, %v1259
        %v1352 = vpack.c.bf16 %v1266, %v1266
        %v1353 = vpack.c.bf16 %v1273, %v1273
        %v1354 = vpack.c.bf16 %v1280, %v1280
        %v1355 = vpack.c.bf16 %v1287, %v1287
        %v1356 = vpack.c.bf16 %v1294, %v1294
        %v1357 = vpack.c.bf16 %v1301, %v1301
        %v1358 = vpack.c.bf16 %v1308, %v1308
        %v1359 = vpack.c.bf16 %v1315, %v1315
        %v1360 = vpack.c.bf16 %v1322, %v1322
        %v1361 = vpack.c.bf16 %v1329, %v1329
        %v1394 = vunpack.c.l.b16 %v1330
        %v1395 = vunpack.c.l.b16 %v1331
        %v1396 = vunpack.c.l.b16 %v1332
        %v1397 = vunpack.c.l.b16 %v1333
        %v1398 = vunpack.c.l.b16 %v1334
        %v1399 = vunpack.c.l.b16 %v1335
        %v1400 = vunpack.c.l.b16 %v1336
        %v1401 = vunpack.c.l.b16 %v1337
        %v1402 = vunpack.c.l.b16 %v1338
        %v1403 = vunpack.c.l.b16 %v1339
        %v1404 = vunpack.c.l.b16 %v1340
        %v1405 = vunpack.c.l.b16 %v1341
        %v1406 = vunpack.c.l.b16 %v1342
        %v1407 = vunpack.c.l.b16 %v1343
        %v1408 = vunpack.c.l.b16 %v1344
        %v1409 = vunpack.c.l.b16 %v1345
        %v1410 = vunpack.c.l.b16 %v1346
        %v1411 = vunpack.c.l.b16 %v1347
        %v1412 = vunpack.c.l.b16 %v1348
        %v1413 = vunpack.c.l.b16 %v1349
        %v1414 = vunpack.c.l.b16 %v1350
        %v1415 = vunpack.c.l.b16 %v1351
        %v1416 = vunpack.c.l.b16 %v1352
        %v1417 = vunpack.c.l.b16 %v1353
        %v1418 = vunpack.c.l.b16 %v1354
        %v1419 = vunpack.c.l.b16 %v1355
        %v1420 = vunpack.c.l.b16 %v1356
        %v1421 = vunpack.c.l.b16 %v1357
        %v1422 = vunpack.c.l.b16 %v1358
        %v1423 = vunpack.c.l.b16 %v1359
        %v1424 = vunpack.c.l.b16 %v1360
        %v1425 = vunpack.c.l.b16 %v1361
        %v1426 = vpack.c.b16 %v1394, %v1394
        %v1427 = vpack.c.b16 %v1395, %v1395
        %v1428 = vpack.c.b16 %v1396, %v1396
        %v1429 = vpack.c.b16 %v1397, %v1397
        %v1430 = vpack.c.b16 %v1398, %v1398
        %v1431 = vpack.c.b16 %v1399, %v1399
        %v1432 = vpack.c.b16 %v1400, %v1400
        %v1433 = vpack.c.b16 %v1401, %v1401
        %v1434 = vpack.c.b16 %v1402, %v1402
        %v1435 = vpack.c.b16 %v1403, %v1403
        %v1436 = vpack.c.b16 %v1404, %v1404
        %v1437 = vpack.c.b16 %v1405, %v1405
        %v1438 = vpack.c.b16 %v1406, %v1406
        %v1439 = vpack.c.b16 %v1407, %v1407
        %v1440 = vpack.c.b16 %v1408, %v1408
        %v1441 = vpack.c.b16 %v1409, %v1409
        %v1442 = vpack.c.b16 %v1410, %v1410
        %v1443 = vpack.c.b16 %v1411, %v1411
        %v1444 = vpack.c.b16 %v1412, %v1412
        %v1445 = vpack.c.b16 %v1413, %v1413
        %v1446 = vpack.c.b16 %v1414, %v1414
        %v1447 = vpack.c.b16 %v1415, %v1415
        %v1448 = vpack.c.b16 %v1416, %v1416
        %v1449 = vpack.c.b16 %v1417, %v1417
        %v1450 = vpack.c.b16 %v1418, %v1418
        %v1451 = vpack.c.b16 %v1419, %v1419
        %v1452 = vpack.c.b16 %v1420, %v1420
        %v1453 = vpack.c.b16 %v1421, %v1421
        %v1454 = vpack.c.b16 %v1422, %v1422
        %v1455 = vpack.c.b16 %v1423, %v1423
        %v1456 = vpack.c.b16 %v1424, %v1424
        %v1457 = vpack.c.b16 %v1425, %v1425
        %v1458 = vunpack.c.l.b16 %v1426
        %v1459 = vunpack.c.l.b16 %v1427
        %v1460 = vunpack.c.l.b16 %v1428
        %v1461 = vunpack.c.l.b16 %v1429
        %v1462 = vunpack.c.l.b16 %v1430
        %v1463 = vunpack.c.l.b16 %v1431
        %v1464 = vunpack.c.l.b16 %v1432
        %v1465 = vunpack.c.l.b16 %v1433
        %v1466 = vunpack.c.l.b16 %v1434
        %v1467 = vunpack.c.l.b16 %v1435
        %v1468 = vunpack.c.l.b16 %v1436
        %v1469 = vunpack.c.l.b16 %v1437
        %v1470 = vunpack.c.l.b16 %v1438
        %v1471 = vunpack.c.l.b16 %v1439
        %v1472 = vunpack.c.l.b16 %v1440
        %v1473 = vunpack.c.l.b16 %v1441
        %v1474 = vunpack.c.l.b16 %v1442
        %v1475 = vunpack.c.l.b16 %v1443
        %v1476 = vunpack.c.l.b16 %v1444
        %v1477 = vunpack.c.l.b16 %v1445
        %v1478 = vunpack.c.l.b16 %v1446
        %v1479 = vunpack.c.l.b16 %v1447
        %v1480 = vunpack.c.l.b16 %v1448
        %v1481 = vunpack.c.l.b16 %v1449
        %v1482 = vunpack.c.l.b16 %v1450
        %v1483 = vunpack.c.l.b16 %v1451
        %v1484 = vunpack.c.l.b16 %v1452
        %v1485 = vunpack.c.l.b16 %v1453
        %v1486 = vunpack.c.l.b16 %v1454
        %v1487 = vunpack.c.l.b16 %v1455
        %v1488 = vunpack.c.l.b16 %v1456
        %v1489 = vunpack.c.l.b16 %v1457
        %vm1490 = vcmask 1041409
        %v1491 = vsel %vm1490, %v1459, %v1458
        %vm1492 = vcmask 1042434
        %v1493 = vsel %vm1492, %v1460, %v1491
        %vm1494 = vcmask 1043459
        %v1495 = vsel %vm1494, %v1461, %v1493
        %vm1496 = vcmask 1044484
        %v1497 = vsel %vm1496, %v1462, %v1495
        %vm1498 = vcmask 1045509
        %v1499 = vsel %vm1498, %v1463, %v1497
        %vm1500 = vcmask 1046534
        %v1501 = vsel %vm1500, %v1464, %v1499
        %vm1502 = vcmask 1047559
        %v1503 = vsel %vm1502, %v1465, %v1501
        %v1504 = vsel %vm1490, %v1467, %v1466
        %v1505 = vsel %vm1492, %v1468, %v1504
        %v1506 = vsel %vm1494, %v1469, %v1505
        %v1507 = vsel %vm1496, %v1470, %v1506
        %v1508 = vsel %vm1498, %v1471, %v1507
        %v1509 = vsel %vm1500, %v1472, %v1508
        %v1510 = vsel %vm1502, %v1473, %v1509
        %v1511 = vsel %vm1490, %v1475, %v1474
        %v1512 = vsel %vm1492, %v1476, %v1511
        %v1513 = vsel %vm1494, %v1477, %v1512
        %v1514 = vsel %vm1496, %v1478, %v1513
        %v1515 = vsel %vm1498, %v1479, %v1514
        %v1516 = vsel %vm1500, %v1480, %v1515
        %v1517 = vsel %vm1502, %v1481, %v1516
        %v1518 = vsel %vm1490, %v1483, %v1482
        %v1519 = vsel %vm1492, %v1484, %v1518
        %v1520 = vsel %vm1494, %v1485, %v1519
        %v1521 = vsel %vm1496, %v1486, %v1520
        %v1522 = vsel %vm1498, %v1487, %v1521
        %v1523 = vsel %vm1500, %v1488, %v1522
        %v1524 = vsel %vm1502, %v1489, %v1523
        %v1525 = vpack.c.b16 %v1503, %v1503
        %v1526 = vpack.c.b16 %v1510, %v1510
        %v1527 = vpack.c.b16 %v1517, %v1517
        %v1528 = vpack.c.b16 %v1524, %v1524
        %vm1533 = vcmask 60416
        %1534 = vst.msk [vmem:[%s270] sm:$0xf] %vm1533, %v1525
        %1535 = vst.msk [vmem:[%s270 + $0x4] sm:$0xf] %vm1533, %v1526
        %1536 = vst.msk [vmem:[%s270 + $0x8] sm:$0xf] %vm1533, %v1527
        %1537 = vst.msk [vmem:[%s270 + $0xc] sm:$0xf] %vm1533, %v1528
        %s1538 = sand.u32 %s142, 1
        %s1539 = scalar_lea.sflag [#allocation3], %s1538
        %s1540 = sand.u32 %s142, 1
        %s1541 = smul.addr %s1540, 16
        %s1542 = scalar_lea.vmem [#allocation2], %s1541
        // Predicated region
        $region37: #{tpu_custom_call.1} parent=35 // pred_check
          %p1543 = pneg %p152
        $region38: #{tpu_custom_call.1} parent=35 // pred_check_branch
          %1545 = sbr.rel (%p1543) target = $region40
        $region39: #{tpu_custom_call.1} parent=35 // pred_region
          %s1546 = smul.u32 4, %s23
          %s1548 = ssub.s32 256, 256
          %1549 = vsyncadd %s1539, %s1548
          %s1550 = smul.addr %s22, 8
          %s1551 = sadd.s32 %s1546, %s1550
          %s1552 = smul.addr %s1551, 64
          %s1553 = scalar_lea.hbm %s4, %s1552
          %s1554 = sshll.u32 %s1542, 4
          %s1555 = int_to_ptr.vmem [resolvable:$true] %s1554
          %1560 = dma.vmem_to_hbm [thread:$0]  %s1555, 256, %s1553, %s1539, 64, 64, 4
        $region40: #{tpu_custom_call.1} parent=35 // pred_fallthru
          _
      $region36: #{tpu_custom_call.1} parent=5 // pred_fallthru
        _
      %p1561 = scmp.le.s32.totalorder 2, %s13
      // Predicated region
      $region41: #{tpu_custom_call.1} parent=5 // pred_check
        %p1562 = pneg %p1561
      $region42: #{tpu_custom_call.1} parent=5 // pred_check_branch
        %1564 = sbr.rel (%p1562) target = $region44
      $region43: #{tpu_custom_call.1} parent=5 // pred_region
        %s1565 = ssub.s32 %s13, 2
        // Predicated region
        $region45: #{tpu_custom_call.1} parent=43 // pred_check
          %p1566 = pneg %p158
        $region46: #{tpu_custom_call.1} parent=43 // pred_check_branch
          %1568 = sbr.rel (%p1566) target = $region48
        $region47: #{tpu_custom_call.1} parent=43 // pred_region
          %s1569 = sand.u32 %s143, 1
          %s1570 = scalar_lea.sflag [#allocation3], %s1569
          %s1571 = sand.u32 %s143, 1
          %s1572 = smul.addr %s1571, 16
          %s1573 = scalar_lea.vmem [#allocation2], %s1572
          %1574 = dma.done %s1570, 256
        $region48: #{tpu_custom_call.1} parent=43 // pred_fallthru
          _
      $region44: #{tpu_custom_call.1} parent=5 // pred_fallthru
        _
    $region6: #{tpu_custom_call.1} parent=1 // loop_footer
      %s17 = sadd.s32 1, %s13
    $region7: #{tpu_custom_call.1} parent=1 // loop_footer_branch
      %12 = sbr.rel target = $region3
    $region8: #{tpu_custom_call.1} parent=1 // loop_exit
      _
    %1575 = vsyncpa [#allocation3], 1
    %s1576 = scalar_lea.sflag [#allocation3], 1
    %1577 = vsyncpa %s1576, 1

</llo_original>
